<compile_context>
chip_gen: v7x
topology: tpu7x:2x2x1
jax: 0.10.0
libtpu: 0.0.40
codegen_flags: <defaults>
</compile_context>

<pallas_src>
import jax
import jax.numpy as jnp
from jax.experimental import pallas as pl
from jax.experimental.pallas import tpu as pltpu


def dqn_forward_kernel(x_ref, w1_ref, b1_ref, w2_ref, b2_ref, w3_ref, b3_ref,
                       q_ref):
    x = x_ref[...]                                               # (TB, S) f32

    # fc1 + ReLU : bf16 operands -> MXU, f32 accumulate; bias/ReLU in f32 (VPU)
    h1 = jnp.dot(x.astype(jnp.bfloat16), w1_ref[...],
                 preferred_element_type=jnp.float32)
    h1 = jnp.maximum(h1 + b1_ref[...], 0.0)                      # (TB, H) f32

    # fc2 + ReLU
    h2 = jnp.dot(h1.astype(jnp.bfloat16), w2_ref[...],
                 preferred_element_type=jnp.float32)
    h2 = jnp.maximum(h2 + b2_ref[...], 0.0)                      # (TB, H) f32

    # fc3 (raw Q-values; output block is exactly (TB, num_actions))
    q = jnp.dot(h2.astype(jnp.bfloat16), w3_ref[...],
                preferred_element_type=jnp.float32)
    q = q + b3_ref[...]                                          # (TB, A) f32

    q_ref[...] = q.astype(q_ref.dtype)


def _round_up(x, m):
    return ((x + m - 1) // m) * m


def _choose_batch_tile(batch):
    """Adaptive batch tile: small batches -> single tight tile; large batches
    -> <=512-row tiles with >=2 balanced tiles (v7x megacore)."""
    rb = _round_up(max(batch, 1), 8)
    if rb <= 128:
        return rb                       # one small tile, no 128-row pad waste
    half = _round_up(pl.cdiv(rb, 2), 8)
    return min(512, half)


def dqn_forward(x, params, *, batch_tile=None):
    """Full MLP forward pass as one fused, batch-tiled Pallas call."""
    w1, b1, w2, b2, w3, b3 = params
    batch, state_dim = x.shape
    hidden = w1.shape[1]
    num_actions = w3.shape[1]

    tb = batch_tile if batch_tile is not None else _choose_batch_tile(batch)
    grid = (pl.cdiv(batch, tb),)        # ragged last block handled by Pallas

    const = lambda i: (0, 0)            # weights/biases: DMA'd once, VMEM-resident

    flops = 2 * batch * (state_dim * hidden + hidden * hidden
                         + hidden * num_actions)
    param_bytes = sum(int(p.size) * p.dtype.itemsize
                      for p in (w1, b1, w2, b2, w3, b3))
    bytes_accessed = int(x.size) * 4 + param_bytes + batch * num_actions * 4

    return pl.pallas_call(
        dqn_forward_kernel,
        out_shape=jax.ShapeDtypeStruct((batch, num_actions), jnp.float32),
        grid=grid,
        in_specs=[
            pl.BlockSpec((tb, state_dim), lambda i: (i, 0)),     # x tile
            pl.BlockSpec((state_dim, hidden), const),            # w1 (bf16)
            pl.BlockSpec((1, hidden), const),                    # b1 (f32)
            pl.BlockSpec((hidden, hidden), const),               # w2 (bf16)
            pl.BlockSpec((1, hidden), const),                    # b2 (f32)
            pl.BlockSpec((hidden, num_actions), const),          # w3 (bf16)
            pl.BlockSpec((1, num_actions), const),               # b3 (f32)
        ],
        out_specs=pl.BlockSpec((tb, num_actions), lambda i: (i, 0)),
        compiler_params=pltpu.CompilerParams(
            dimension_semantics=("parallel",),                   # 2 TCs on v7x
            vmem_limit_bytes=32 * 1024 * 1024),
        cost_estimate=pl.CostEstimate(flops=flops, transcendentals=0,
                                      bytes_accessed=bytes_accessed),
    )(x, w1, b1, w2, b2, w3, b3)


def init_params(key, state_dim, hidden_dim, num_actions):
    """Deterministic synthetic init (PyTorch-Linear-style uniform bounds).
    Weights stored bf16 (MXU-native, half the weight DMA); biases f32."""
    ks = jax.random.split(key, 6)

    def linear(kw, kb, fan_in, fan_out):
        bound = 1.0 / jnp.sqrt(jnp.asarray(fan_in, jnp.float32))
        w = jax.random.uniform(kw, (fan_in, fan_out), jnp.float32, -bound, bound)
        b = jax.random.uniform(kb, (1, fan_out), jnp.float32, -bound, bound)
        return w.astype(jnp.bfloat16), b

    w1, b1 = linear(ks[0], ks[1], state_dim, hidden_dim)
    w2, b2 = linear(ks[2], ks[3], hidden_dim, hidden_dim)
    w3, b3 = linear(ks[4], ks[5], hidden_dim, num_actions)
    return (w1, b1, w2, b2, w3, b3)


def dqn_forward_ref(x, params):
    """Pure-JAX reference with the SAME numerics as the kernel
    (bf16 matmul operands, f32 accumulate, f32 bias/ReLU)."""
    w1, b1, w2, b2, w3, b3 = params
    h1 = jnp.maximum(jnp.dot(x.astype(jnp.bfloat16), w1,
                             preferred_element_type=jnp.float32) + b1, 0.0)
    h2 = jnp.maximum(jnp.dot(h1.astype(jnp.bfloat16), w2,
                             preferred_element_type=jnp.float32) + b2, 0.0)
    return jnp.dot(h2.astype(jnp.bfloat16), w3,
                   preferred_element_type=jnp.float32) + b3


def dqn_forward_ref_f32(x, params):
    """Full-f32 reference mirroring the PyTorch module (sanity check only)."""
    w1, b1, w2, b2, w3, b3 = params
    w1, w2, w3 = (w.astype(jnp.float32) for w in (w1, w2, w3))
    h1 = jnp.maximum(x @ w1 + b1, 0.0)
    h2 = jnp.maximum(h1 @ w2 + b2, 0.0)
    return h2 @ w3 + b3


if __name__ == "__main__":
    state_dim = 32
    hidden_dim = 128
    num_actions = 2
    batch = 8                       # tiny inference batch -> single 8-row tile

    key = jax.random.PRNGKey(0)
    k_x, k_p = jax.random.split(key)

    x = jax.random.normal(k_x, (batch, state_dim), jnp.float32)
    params = init_params(k_p, state_dim, hidden_dim, num_actions)

    q = jax.block_until_ready(dqn_forward(x, params))
    assert q.shape == (batch, num_actions)

    # Matched-numerics reference (bf16 matmul operands): tight tolerance.
    q_ref = dqn_forward_ref(x, params)
    assert jnp.allclose(q, q_ref, atol=1e-4, rtol=1e-4)

    # Full-f32 PyTorch-style reference: relaxed tolerance (bf16 operand rounding).
    q_f32 = dqn_forward_ref_f32(x, params)
    assert jnp.allclose(q, q_f32, atol=5e-2, rtol=5e-2)

    # Larger, non-multiple-of-tile batch: multi-tile grid + ragged last block.
    x_big = jax.random.normal(k_x, (300, state_dim), jnp.float32)
    q_big = jax.block_until_ready(dqn_forward(x_big, params))
    assert q_big.shape == (300, num_actions)
    assert jnp.allclose(q_big, dqn_forward_ref(x_big, params),
                        atol=1e-4, rtol=1e-4)

    print("KERNEL_OK")
</pallas_src>

<mosaic_0001>
module attributes {stable_mosaic.version = 11 : i64} {
  func.func @dqn_forward_kernel(%arg0: i32, %arg1: memref<8x32xf32, #tpu.memory_space<vmem>>, %arg2: memref<32x128xbf16, #tpu.memory_space<vmem>>, %arg3: memref<1x128xf32, #tpu.memory_space<vmem>>, %arg4: memref<128x128xbf16, #tpu.memory_space<vmem>>, %arg5: memref<1x128xf32, #tpu.memory_space<vmem>>, %arg6: memref<128x2xbf16, #tpu.memory_space<vmem>>, %arg7: memref<1x2xf32, #tpu.memory_space<vmem>>, %arg8: memref<8x2xf32, #tpu.memory_space<vmem>>) attributes {dimension_semantics = [#tpu.dimension_semantics<parallel>], iteration_bounds = array<i64: 1>, scalar_prefetch = 0 : i64, scratch_operands = 0 : i64, tpu.core_type = #tpu.core_type<tc>, window_params = [{transform_indices = @transform_0, window_bounds = array<i64: 8, 32>}, {pipeline_mode = #tpu.pipeline_mode<synchronous>, transform_indices = @transform_1, window_bounds = array<i64: 32, 128>}, {pipeline_mode = #tpu.pipeline_mode<synchronous>, transform_indices = @transform_2, window_bounds = array<i64: 1, 128>}, {pipeline_mode = #tpu.pipeline_mode<synchronous>, transform_indices = @transform_3, window_bounds = array<i64: 128, 128>}, {pipeline_mode = #tpu.pipeline_mode<synchronous>, transform_indices = @transform_4, window_bounds = array<i64: 1, 128>}, {pipeline_mode = #tpu.pipeline_mode<synchronous>, transform_indices = @transform_5, window_bounds = array<i64: 128, 2>}, {pipeline_mode = #tpu.pipeline_mode<synchronous>, transform_indices = @transform_6, window_bounds = array<i64: 1, 2>}, {transform_indices = @transform_7, window_bounds = array<i64: 8, 2>}]} {
    %c0 = arith.constant 0 : index
    %c0_0 = arith.constant 0 : index
    %0 = vector.load %arg1[%c0, %c0_0] : memref<8x32xf32, #tpu.memory_space<vmem>>, vector<8x32xf32>
    %1 = arith.truncf %0 : vector<8x32xf32> to vector<8x32xbf16>
    %c0_1 = arith.constant 0 : index
    %c0_2 = arith.constant 0 : index
    %2 = vector.load %arg2[%c0_1, %c0_2] : memref<32x128xbf16, #tpu.memory_space<vmem>>, vector<32x128xbf16>
    %cst = arith.constant dense<0.000000e+00> : vector<8x128xf32>
    %3 = tpu.matmul %1, %2, %cst {dimension_numbers = #tpu.dot_dimension_numbers<[1], [0], [0], [1], [0, 0, 1, 1], [], []>} : vector<8x32xbf16>, vector<32x128xbf16>, vector<8x128xf32> -> vector<8x128xf32>
    %c0_3 = arith.constant 0 : index
    %c0_4 = arith.constant 0 : index
    %4 = vector.load %arg3[%c0_3, %c0_4] : memref<1x128xf32, #tpu.memory_space<vmem>>, vector<1x128xf32>
    %5 = vector.broadcast %4 : vector<1x128xf32> to vector<8x128xf32>
    %6 = arith.addf %3, %5 : vector<8x128xf32>
    %cst_5 = arith.constant 0.000000e+00 : f32
    %7 = vector.broadcast %cst_5 : f32 to vector<8x128xf32>
    %8 = arith.maximumf %6, %7 : vector<8x128xf32>
    %9 = arith.truncf %8 : vector<8x128xf32> to vector<8x128xbf16>
    %c0_6 = arith.constant 0 : index
    %c0_7 = arith.constant 0 : index
    %10 = vector.load %arg4[%c0_6, %c0_7] : memref<128x128xbf16, #tpu.memory_space<vmem>>, vector<128x128xbf16>
    %cst_8 = arith.constant dense<0.000000e+00> : vector<8x128xf32>
    %11 = tpu.matmul %9, %10, %cst_8 {dimension_numbers = #tpu.dot_dimension_numbers<[1], [0], [0], [1], [0, 0, 1, 1], [], []>} : vector<8x128xbf16>, vector<128x128xbf16>, vector<8x128xf32> -> vector<8x128xf32>
    %c0_9 = arith.constant 0 : index
    %c0_10 = arith.constant 0 : index
    %12 = vector.load %arg5[%c0_9, %c0_10] : memref<1x128xf32, #tpu.memory_space<vmem>>, vector<1x128xf32>
    %13 = vector.broadcast %12 : vector<1x128xf32> to vector<8x128xf32>
    %14 = arith.addf %11, %13 : vector<8x128xf32>
    %cst_11 = arith.constant 0.000000e+00 : f32
    %15 = vector.broadcast %cst_11 : f32 to vector<8x128xf32>
    %16 = arith.maximumf %14, %15 : vector<8x128xf32>
    %17 = arith.truncf %16 : vector<8x128xf32> to vector<8x128xbf16>
    %c0_12 = arith.constant 0 : index
    %c0_13 = arith.constant 0 : index
    %18 = vector.load %arg6[%c0_12, %c0_13] : memref<128x2xbf16, #tpu.memory_space<vmem>>, vector<128x2xbf16>
    %cst_14 = arith.constant dense<0.000000e+00> : vector<8x2xf32>
    %19 = tpu.matmul %17, %18, %cst_14 {dimension_numbers = #tpu.dot_dimension_numbers<[1], [0], [0], [1], [0, 0, 1, 1], [], []>} : vector<8x128xbf16>, vector<128x2xbf16>, vector<8x2xf32> -> vector<8x2xf32>
    %c0_15 = arith.constant 0 : index
    %c0_16 = arith.constant 0 : index
    %20 = vector.load %arg7[%c0_15, %c0_16] : memref<1x2xf32, #tpu.memory_space<vmem>>, vector<1x2xf32>
    %21 = vector.broadcast %20 : vector<1x2xf32> to vector<8x2xf32>
    %22 = arith.addf %19, %21 : vector<8x2xf32>
    %c0_17 = arith.constant 0 : index
    %c0_18 = arith.constant 0 : index
    %23 = vector.load %arg8[%c0_17, %c0_18] : memref<8x2xf32, #tpu.memory_space<vmem>>, vector<8x2xf32>
    tpu.vector_store %arg8[%c0_17, %c0_18], %22 {strides = array<i32>} : memref<8x2xf32, #tpu.memory_space<vmem>>, vector<8x2xf32>,
    return
  }
  func.func @transform_0(%arg0: i32) -> (i32, i32) {
    %c0_i32 = arith.constant 0 : i32
    %c0_i32_0 = arith.constant 0 : i32
    return %arg0, %c0_i32 : i32, i32
  }
  func.func @transform_1(%arg0: i32) -> (i32, i32) {
    %c0_i32 = arith.constant 0 : i32
    %c0_i32_0 = arith.constant 0 : i32
    %c0_i32_1 = arith.constant 0 : i32
    return %c0_i32, %c0_i32_0 : i32, i32
  }
  func.func @transform_2(%arg0: i32) -> (i32, i32) {
    %c0_i32 = arith.constant 0 : i32
    %c0_i32_0 = arith.constant 0 : i32
    %c0_i32_1 = arith.constant 0 : i32
    return %c0_i32, %c0_i32_0 : i32, i32
  }
  func.func @transform_3(%arg0: i32) -> (i32, i32) {
    %c0_i32 = arith.constant 0 : i32
    %c0_i32_0 = arith.constant 0 : i32
    %c0_i32_1 = arith.constant 0 : i32
    return %c0_i32, %c0_i32_0 : i32, i32
  }
  func.func @transform_4(%arg0: i32) -> (i32, i32) {
    %c0_i32 = arith.constant 0 : i32
    %c0_i32_0 = arith.constant 0 : i32
    %c0_i32_1 = arith.constant 0 : i32
    return %c0_i32, %c0_i32_0 : i32, i32
  }
  func.func @transform_5(%arg0: i32) -> (i32, i32) {
    %c0_i32 = arith.constant 0 : i32
    %c0_i32_0 = arith.constant 0 : i32
    %c0_i32_1 = arith.constant 0 : i32
    return %c0_i32, %c0_i32_0 : i32, i32
  }
  func.func @transform_6(%arg0: i32) -> (i32, i32) {
    %c0_i32 = arith.constant 0 : i32
    %c0_i32_0 = arith.constant 0 : i32
    %c0_i32_1 = arith.constant 0 : i32
    return %c0_i32, %c0_i32_0 : i32, i32
  }
  func.func @transform_7(%arg0: i32) -> (i32, i32) {
    %c0_i32 = arith.constant 0 : i32
    %c0_i32_0 = arith.constant 0 : i32
    return %arg0, %c0_i32 : i32, i32
  }
}

</mosaic_0001>

<llo_original>
// kernel: tpu_custom_call.1
$region0: #{tpu_custom_call.1}
  #allocation0 [shape = 'u32[]', space=smem, size = 0x4, offset = 0x4, fixed_abs, tag = 'smem constant byte address 0x4 - core index']
  #allocation1 [shape = 'u32[144,128]{1,0:T(1,128)}', space=vmem, size = 0x12000, scoped, tag = 'internal scratch']
  %s0 = inlined_call_operand.vmem [shape: f32[8,32], index: 0, kind: input, shape index: {}]
  %s1 = inlined_call_operand.hbm [shape: bf16[32,128], index: 1, kind: input, shape index: {}]
  %s2 = inlined_call_operand.vmem [shape: f32[1,128], index: 2, kind: input, shape index: {}]
  %s3 = inlined_call_operand.vmem [shape: bf16[128,128], index: 3, kind: input, shape index: {}]
  %s4 = inlined_call_operand.vmem [shape: f32[1,128], index: 4, kind: input, shape index: {}]
  %s5 = inlined_call_operand.vmem [shape: bf16[128,2], index: 5, kind: input, shape index: {}]
  %s6 = inlined_call_operand.vmem [shape: f32[1,2], index: 6, kind: input, shape index: {}]
  %s7 = inlined_call_operand.vmem [shape: f32[8,2], index: 7, kind: output, shape index: {}]
  %s8 = sld [smem:[#allocation0]]
  $region42: #{tpu_custom_call.1} parent=0
    _
  %s10 = ssub.s32 1, %s8
  %s11 = scalar_select 0, %s10, %s8
  $region1: #{tpu_custom_call.1} parent=0
    #allocation2 [shape = 'u8[8192]{0}', space=vmem, size = 0x2000, scoped, tag = 'input window, operand 1, single buffered']
    #allocation3 [shape = 's32[1]{0}', space=sflag, size = 0x4, scoped, tag = 'scoped memory for tpu_custom_call.1']
    %12 = vsyncpa [#allocation3], 0
    // Predicated region
    $region2: #{tpu_custom_call.1} parent=1 // pred_check
      _
    $region3: #{tpu_custom_call.1} parent=1 // pred_check_branch
      %14 = sbr.rel (0) target = $region5
    $region4: #{tpu_custom_call.1} parent=1 // pred_region
      _
    $region5: #{tpu_custom_call.1} parent=1 // pred_fallthru
      _
    // Predicated region
    $region6: #{tpu_custom_call.1} parent=1 // pred_check
      _
    $region7: #{tpu_custom_call.1} parent=1 // pred_check_branch
      %16 = sbr.rel (0) target = $region9
    $region8: #{tpu_custom_call.1} parent=1 // pred_region
      %s18 = ssub.s32 256, 256
      %19 = vsyncadd [#allocation3], %s18
      %s20 = sshll.u32 [#allocation2], 4
      %s21 = int_to_ptr.vmem [resolvable:$true] %s20
      %26 = dma.hbm_to_vmem [thread:$0]  %s1, 256, %s21, [#allocation3], 64, 64, 4
    $region9: #{tpu_custom_call.1} parent=1 // pred_fallthru
      _
    // Predicated region
    $region10: #{tpu_custom_call.1} parent=1 // pred_check
      _
    $region11: #{tpu_custom_call.1} parent=1 // pred_check_branch
      %28 = sbr.rel (0) target = $region13
    $region12: #{tpu_custom_call.1} parent=1 // pred_region
      _
    $region13: #{tpu_custom_call.1} parent=1 // pred_fallthru
      _
    // Predicated region
    $region14: #{tpu_custom_call.1} parent=1 // pred_check
      _
    $region15: #{tpu_custom_call.1} parent=1 // pred_check_branch
      %30 = sbr.rel (0) target = $region17
    $region16: #{tpu_custom_call.1} parent=1 // pred_region
      _
    $region17: #{tpu_custom_call.1} parent=1 // pred_fallthru
      _
    // Predicated region
    $region18: #{tpu_custom_call.1} parent=1 // pred_check
      _
    $region19: #{tpu_custom_call.1} parent=1 // pred_check_branch
      %32 = sbr.rel (0) target = $region21
    $region20: #{tpu_custom_call.1} parent=1 // pred_region
      _
    $region21: #{tpu_custom_call.1} parent=1 // pred_fallthru
      _
    // Predicated region
    $region22: #{tpu_custom_call.1} parent=1 // pred_check
      _
    $region23: #{tpu_custom_call.1} parent=1 // pred_check_branch
      %34 = sbr.rel (0) target = $region25
    $region24: #{tpu_custom_call.1} parent=1 // pred_region
      _
    $region25: #{tpu_custom_call.1} parent=1 // pred_fallthru
      _
    // Predicated region
    $region26: #{tpu_custom_call.1} parent=1 // pred_check
      _
    $region27: #{tpu_custom_call.1} parent=1 // pred_check_branch
      %36 = sbr.rel (0) target = $region29
    $region28: #{tpu_custom_call.1} parent=1 // pred_region
      _
    $region29: #{tpu_custom_call.1} parent=1 // pred_fallthru
      _
    // Predicated region
    $region30: #{tpu_custom_call.1} parent=1 // pred_check
      _
    $region31: #{tpu_custom_call.1} parent=1 // pred_check_branch
      %38 = sbr.rel (0) target = $region33
    $region32: #{tpu_custom_call.1} parent=1 // pred_region
      %39 = dma.done [#allocation3], 256
    $region33: #{tpu_custom_call.1} parent=1 // pred_fallthru
      _
    %v41 = vld [vmem:[%s0] sm:$0xff]
    %v42 = vpack.c.bf16 %v41, %v41
    %v43 = vld [vmem:[#allocation2] sm:$0xf]
    %v44 = vld [vmem:[#allocation2 + $0x4] sm:$0xf]
    %v45 = vld [vmem:[#allocation2 + $0x8] sm:$0xf]
    %v46 = vld [vmem:[#allocation2 + $0xc] sm:$0xf]
    %v47 = vld [vmem:[%s2] sm:$0x1]
    %v49 = vlaneseq
    %v50 = vshrl.u32 %v49, 7
    %v51 = vsub.s32 0, %v50
    %v52 = vrot.slane %v47, %v51
    %v58 = vunpack.c.l.b16 %v43
    %v59 = vunpack.c.l.b16 %v44
    %v60 = vunpack.c.l.b16 %v45
    %v61 = vunpack.c.l.b16 %v46
    %v62 = vpack.c.b16 %v59, %v58
    %v63 = vpack.c.b16 %v61, %v60
    %vm66 = vcmask 261120
    %v68 = vsel %vm66, %v42, 0
    %70 = vmatprep.subr.bf16.mxu0 0
    %71 = vmatpush1.bf16.msra.mxu0 %v62
    %72 = vmatprep.subr.bf16.mxu0 0
    %73 = vmatpush1.bf16.msra.mxu0 %v63
    %74 = vmatprep.subr.bf16.mxu0 0
    %75 = vmatpush1.bf16.msra.mxu0 0
    %76 = vmatprep.subr.bf16.mxu0 0
    %77 = vmatpush1.bf16.msra.mxu0 0
    %78 = vmatprep.subr.bf16.mxu0 0
    %79 = vmatpush1.bf16.msra.mxu0 0
    %80 = vmatprep.subr.bf16.mxu0 0
    %81 = vmatpush1.bf16.msra.mxu0 0
    %82 = vmatprep.subr.bf16.mxu0 0
    %83 = vmatpush1.bf16.msra.mxu0 0
    %84 = vmatprep.subr.bf16.mxu0 0
    %85 = vmatpush1.bf16.msra.mxu0 0
    %86 = vmatprep.subr.bf16.mxu0 0
    %87 = vmatpush1.bf16.msra.mxu0 0
    %88 = vmatprep.subr.bf16.mxu0 0
    %89 = vmatpush1.bf16.msra.mxu0 0
    %90 = vmatprep.subr.bf16.mxu0 0
    %91 = vmatpush1.bf16.msra.mxu0 0
    %92 = vmatprep.subr.bf16.mxu0 0
    %93 = vmatpush1.bf16.msra.mxu0 0
    %94 = vmatprep.subr.bf16.mxu0 0
    %95 = vmatpush1.bf16.msra.mxu0 0
    %96 = vmatprep.subr.bf16.mxu0 0
    %97 = vmatpush1.bf16.msra.mxu0 0
    %98 = vmatprep.subr.bf16.mxu0 0
    %99 = vmatpush1.bf16.msra.mxu0 0
    %100 = vmatprep.subr.bf16.mxu0 0
    %101 = vmatpush1.bf16.msra.mxu0 0
    %102 = vmatprep.mubr.bf16.mxu0 0
    %103 = vmatmul.mubr.bf16.gmra.mrb[0].mxu0 %v68
    %v104 = vpop.f32.mrb[0].mxu0
    %v105 = vadd.f32 %v52, %v104
    %v106 = vpop.f32.mrb[0].mxu0
    %v107 = vpop.f32.mrb[0].mxu0
    %v108 = vpop.f32.mrb[0].mxu0
    %109 = vdwg.mxu0
    %v110 = vmax.f32 %v105, 0.0
    %v111 = vpack.c.bf16 %v110, %v110
    %v112 = vld [vmem:[%s3] sm:$0xf]
    %v113 = vld [vmem:[%s3 + $0x4] sm:$0xf]
    %v114 = vld [vmem:[%s3 + $0x8] sm:$0xf]
    %v115 = vld [vmem:[%s3 + $0xc] sm:$0xf]
    %v116 = vld [vmem:[%s3 + $0x10] sm:$0xf]
    %v117 = vld [vmem:[%s3 + $0x14] sm:$0xf]
    %v118 = vld [vmem:[%s3 + $0x18] sm:$0xf]
    %v119 = vld [vmem:[%s3 + $0x1c] sm:$0xf]
    %v120 = vld [vmem:[%s3 + $0x20] sm:$0xf]
    %v121 = vld [vmem:[%s3 + $0x24] sm:$0xf]
    %v122 = vld [vmem:[%s3 + $0x28] sm:$0xf]
    %v123 = vld [vmem:[%s3 + $0x2c] sm:$0xf]
    %v124 = vld [vmem:[%s3 + $0x30] sm:$0xf]
    %v125 = vld [vmem:[%s3 + $0x34] sm:$0xf]
    %v126 = vld [vmem:[%s3 + $0x38] sm:$0xf]
    %v127 = vld [vmem:[%s3 + $0x3c] sm:$0xf]
    %v128 = vld [vmem:[%s4] sm:$0x1]
    %v130 = vlaneseq
    %v131 = vshrl.u32 %v130, 7
    %v132 = vsub.s32 0, %v131
    %v133 = vrot.slane %v128, %v132
    %v151 = vunpack.c.l.b16 %v112
    %v152 = vunpack.c.l.b16 %v113
    %v153 = vunpack.c.l.b16 %v114
    %v154 = vunpack.c.l.b16 %v115
    %v155 = vunpack.c.l.b16 %v116
    %v156 = vunpack.c.l.b16 %v117
    %v157 = vunpack.c.l.b16 %v118
    %v158 = vunpack.c.l.b16 %v119
    %v159 = vunpack.c.l.b16 %v120
    %v160 = vunpack.c.l.b16 %v121
    %v161 = vunpack.c.l.b16 %v122
    %v162 = vunpack.c.l.b16 %v123
    %v163 = vunpack.c.l.b16 %v124
    %v164 = vunpack.c.l.b16 %v125
    %v165 = vunpack.c.l.b16 %v126
    %v166 = vunpack.c.l.b16 %v127
    %v167 = vpack.c.b16 %v152, %v151
    %v168 = vpack.c.b16 %v154, %v153
    %v169 = vpack.c.b16 %v156, %v155
    %v170 = vpack.c.b16 %v158, %v157
    %v171 = vpack.c.b16 %v160, %v159
    %v172 = vpack.c.b16 %v162, %v161
    %v173 = vpack.c.b16 %v164, %v163
    %v174 = vpack.c.b16 %v166, %v165
    %183 = vmatprep.subr.bf16.mxu0 0
    %184 = vmatpush1.bf16.msra.mxu0 %v167
    %185 = vmatprep.subr.bf16.mxu0 0
    %186 = vmatpush1.bf16.msra.mxu0 %v168
    %187 = vmatprep.subr.bf16.mxu0 0
    %188 = vmatpush1.bf16.msra.mxu0 %v169
    %189 = vmatprep.subr.bf16.mxu0 0
    %190 = vmatpush1.bf16.msra.mxu0 %v170
    %191 = vmatprep.subr.bf16.mxu0 0
    %192 = vmatpush1.bf16.msra.mxu0 %v171
    %193 = vmatprep.subr.bf16.mxu0 0
    %194 = vmatpush1.bf16.msra.mxu0 %v172
    %195 = vmatprep.subr.bf16.mxu0 0
    %196 = vmatpush1.bf16.msra.mxu0 %v173
    %197 = vmatprep.subr.bf16.mxu0 0
    %198 = vmatpush1.bf16.msra.mxu0 %v174
    %199 = vmatprep.subr.bf16.mxu0 0
    %200 = vmatpush1.bf16.msra.mxu0 0
    %201 = vmatprep.subr.bf16.mxu0 0
    %202 = vmatpush1.bf16.msra.mxu0 0
    %203 = vmatprep.subr.bf16.mxu0 0
    %204 = vmatpush1.bf16.msra.mxu0 0
    %205 = vmatprep.subr.bf16.mxu0 0
    %206 = vmatpush1.bf16.msra.mxu0 0
    %207 = vmatprep.subr.bf16.mxu0 0
    %208 = vmatpush1.bf16.msra.mxu0 0
    %209 = vmatprep.subr.bf16.mxu0 0
    %210 = vmatpush1.bf16.msra.mxu0 0
    %211 = vmatprep.subr.bf16.mxu0 0
    %212 = vmatpush1.bf16.msra.mxu0 0
    %213 = vmatprep.subr.bf16.mxu0 0
    %214 = vmatpush1.bf16.msra.mxu0 0
    %215 = vmatprep.mubr.bf16.mxu0 0
    %216 = vmatmul.mubr.bf16.gmra.mrb[0].mxu0 %v111
    %v217 = vpop.f32.mrb[0].mxu0
    %v218 = vadd.f32 %v133, %v217
    %v219 = vpop.f32.mrb[0].mxu0
    %v220 = vpop.f32.mrb[0].mxu0
    %v221 = vpop.f32.mrb[0].mxu0
    %222 = vdwg.mxu0
    %v223 = vmax.f32 %v218, 0.0
    %v224 = vpack.c.bf16 %v223, %v223
    %v225 = vld [vmem:[%s5] sm:$0xf]
    %v226 = vld [vmem:[%s5 + $0x4] sm:$0xf]
    %v227 = vld [vmem:[%s5 + $0x8] sm:$0xf]
    %v228 = vld [vmem:[%s5 + $0xc] sm:$0xf]
    %v229 = vld [vmem:[%s5 + $0x10] sm:$0xf]
    %v230 = vld [vmem:[%s5 + $0x14] sm:$0xf]
    %v231 = vld [vmem:[%s5 + $0x18] sm:$0xf]
    %v232 = vld [vmem:[%s5 + $0x1c] sm:$0xf]
    %v233 = vld [vmem:[%s5 + $0x20] sm:$0xf]
    %v234 = vld [vmem:[%s5 + $0x24] sm:$0xf]
    %v235 = vld [vmem:[%s5 + $0x28] sm:$0xf]
    %v236 = vld [vmem:[%s5 + $0x2c] sm:$0xf]
    %v237 = vld [vmem:[%s5 + $0x30] sm:$0xf]
    %v238 = vld [vmem:[%s5 + $0x34] sm:$0xf]
    %v239 = vld [vmem:[%s5 + $0x38] sm:$0xf]
    %v240 = vld [vmem:[%s5 + $0x3c] sm:$0xf]
    %v241 = vld [vmem:[%s6] sm:$0x1]
    %v243 = vlaneseq
    %v244 = vshrl.u32 %v243, 7
    %v245 = vsub.s32 0, %v244
    %v246 = vrot.slane %v241, %v245
    %v264 = vunpack.c.l.b16 %v225
    %v265 = vunpack.c.l.b16 %v226
    %v266 = vunpack.c.l.b16 %v227
    %v267 = vunpack.c.l.b16 %v228
    %v268 = vunpack.c.l.b16 %v229
    %v269 = vunpack.c.l.b16 %v230
    %v270 = vunpack.c.l.b16 %v231
    %v271 = vunpack.c.l.b16 %v232
    %v272 = vunpack.c.l.b16 %v233
    %v273 = vunpack.c.l.b16 %v234
    %v274 = vunpack.c.l.b16 %v235
    %v275 = vunpack.c.l.b16 %v236
    %v276 = vunpack.c.l.b16 %v237
    %v277 = vunpack.c.l.b16 %v238
    %v278 = vunpack.c.l.b16 %v239
    %v279 = vunpack.c.l.b16 %v240
    %v280 = vpack.c.b16 %v265, %v264
    %v281 = vpack.c.b16 %v267, %v266
    %v282 = vpack.c.b16 %v269, %v268
    %v283 = vpack.c.b16 %v271, %v270
    %v284 = vpack.c.b16 %v273, %v272
    %v285 = vpack.c.b16 %v275, %v274
    %v286 = vpack.c.b16 %v277, %v276
    %v287 = vpack.c.b16 %v279, %v278
    %296 = vmatprep.subr.bf16.mxu0 0
    %297 = vmatpush1.bf16.msra.mxu0 %v280
    %298 = vmatprep.subr.bf16.mxu0 0
    %299 = vmatpush1.bf16.msra.mxu0 %v281
    %300 = vmatprep.subr.bf16.mxu0 0
    %301 = vmatpush1.bf16.msra.mxu0 %v282
    %302 = vmatprep.subr.bf16.mxu0 0
    %303 = vmatpush1.bf16.msra.mxu0 %v283
    %304 = vmatprep.subr.bf16.mxu0 0
    %305 = vmatpush1.bf16.msra.mxu0 %v284
    %306 = vmatprep.subr.bf16.mxu0 0
    %307 = vmatpush1.bf16.msra.mxu0 %v285
    %308 = vmatprep.subr.bf16.mxu0 0
    %309 = vmatpush1.bf16.msra.mxu0 %v286
    %310 = vmatprep.subr.bf16.mxu0 0
    %311 = vmatpush1.bf16.msra.mxu0 %v287
    %312 = vmatprep.subr.bf16.mxu0 0
    %313 = vmatpush1.bf16.msra.mxu0 0
    %314 = vmatprep.subr.bf16.mxu0 0
    %315 = vmatpush1.bf16.msra.mxu0 0
    %316 = vmatprep.subr.bf16.mxu0 0
    %317 = vmatpush1.bf16.msra.mxu0 0
    %318 = vmatprep.subr.bf16.mxu0 0
    %319 = vmatpush1.bf16.msra.mxu0 0
    %320 = vmatprep.subr.bf16.mxu0 0
    %321 = vmatpush1.bf16.msra.mxu0 0
    %322 = vmatprep.subr.bf16.mxu0 0
    %323 = vmatpush1.bf16.msra.mxu0 0
    %324 = vmatprep.subr.bf16.mxu0 0
    %325 = vmatpush1.bf16.msra.mxu0 0
    %326 = vmatprep.subr.bf16.mxu0 0
    %327 = vmatpush1.bf16.msra.mxu0 0
    %328 = vmatprep.mubr.bf16.mxu0 0
    %329 = vmatmul.mubr.bf16.gmra.mrb[0].mxu0 %v224
    %v330 = vpop.f32.mrb[0].mxu0
    %v331 = vadd.f32 %v246, %v330
    %v332 = vpop.f32.mrb[0].mxu0
    %v333 = vpop.f32.mrb[0].mxu0
    %v334 = vpop.f32.mrb[0].mxu0
    %335 = vdwg.mxu0
    %vm336 = vcmask 15360
    %337 = vst.msk [vmem:[%s7] sm:$0xff] %vm336, %v331
    // Predicated region
    $region34: #{tpu_custom_call.1} parent=1 // pred_check
      _
    $region35: #{tpu_custom_call.1} parent=1 // pred_check_branch
      %339 = sbr.rel (0) target = $region37
    $region36: #{tpu_custom_call.1} parent=1 // pred_region
      _
    $region37: #{tpu_custom_call.1} parent=1 // pred_fallthru
      _
    // Predicated region
    $region38: #{tpu_custom_call.1} parent=1 // pred_check
      _
    $region39: #{tpu_custom_call.1} parent=1 // pred_check_branch
      %341 = sbr.rel (0) target = $region41
    $region40: #{tpu_custom_call.1} parent=1 // pred_region
      _
    $region41: #{tpu_custom_call.1} parent=1 // pred_fallthru
      _
    %342 = vsyncpa [#allocation3], 1

</llo_original>
